<compile_context>
chip_gen: v7x
topology: tpu7x:2x2x1
jax: 0.10.0
libtpu: 0.0.40
codegen_flags: <defaults>
</compile_context>

<pallas_src>
import functools

import jax
import jax.numpy as jnp
from jax import lax
from jax.experimental import pallas as pl
from jax.experimental.pallas import tpu as pltpu


def _round_up(x, m):
    return ((x + m - 1) // m) * m


def _cosine_loss_kernel(e1_ref, e2_ref, w_ref, b_ref, label_ref,
                        score_ref, sqerr_ref, *, eps, batch, tile):
    # e1_ref/e2_ref: (TB, D)   w_ref: (O_pad, D)   b_ref: (1, O_pad)
    # label_ref: (TB, 1)       score_ref/sqerr_ref: (TB, 1)
    dn = (((1,), (1,)), ((), ()))   # contract feature dim of x with dim 1 of W

    r1 = lax.dot_general(e1_ref[...], w_ref[...], dn,
                         preferred_element_type=jnp.float32) + b_ref[...]
    r2 = lax.dot_general(e2_ref[...], w_ref[...], dn,
                         preferred_element_type=jnp.float32) + b_ref[...]

    # Cosine similarity along the feature axis, PyTorch eps semantics:
    #   dot / max(||r1||*||r2||, eps) == dot * rsqrt(max(|r1|^2 |r2|^2, eps^2))
    dot = jnp.sum(r1 * r2, axis=1, keepdims=True)   # (TB, 1)
    n1 = jnp.sum(r1 * r1, axis=1, keepdims=True)
    n2 = jnp.sum(r2 * r2, axis=1, keepdims=True)
    score = dot * lax.rsqrt(jnp.maximum(n1 * n2, eps * eps))
    score_ref[...] = score

    # Per-row squared error; rows past the true batch (ragged last tile) are
    # zeroed so the wrapper's sum / B is exact.
    diff = score - label_ref[...]
    row = pl.program_id(0) * tile + lax.broadcasted_iota(jnp.int32, (tile, 1), 0)
    sqerr_ref[...] = jnp.where(row < batch, diff * diff, 0.0)


def cosine_distance_loss(emb1, emb2, true_label, weight, bias, *, eps=1e-4):
    """emb1, emb2: (B, D); true_label: (B,); weight: (O, D) torch Linear layout;
    bias: (O,).  Returns (scalar loss, score of shape (B,), both f32)."""
    B, D = emb1.shape
    O = weight.shape[0]

    # Zero-pad the Linear output dim to a lane multiple (exact: padded columns
    # contribute 0 to dot / n1 / n2).
    O_pad = _round_up(O, 128)
    if O_pad != O:
        weight = jnp.pad(weight, ((0, O_pad - O), (0, 0)))
        bias = jnp.pad(bias, (0, O_pad - O))
    bias2 = bias.reshape(1, O_pad).astype(jnp.float32)
    label2 = true_label.reshape(B, 1).astype(jnp.float32)

    # Batch tile: biggest tile whose double-buffered embedding DMAs stay inside
    # a conservative VMEM budget (v7x has only 64 MiB physical / 32 MiB scoped).
    itemsize = jnp.dtype(emb1.dtype).itemsize
    emb_budget = 16 * 1024 * 1024                 # 2 inputs x 2 buffers
    tb = emb_budget // (2 * 2 * D * itemsize)
    tb = max(8, min(1024, (tb // 8) * 8))
    tb = min(tb, _round_up(B, 8))
    grid = (pl.cdiv(B, tb),)

    kernel = functools.partial(_cosine_loss_kernel, eps=eps, batch=B, tile=tb)

    score2, sqerr = pl.pallas_call(
        kernel,
        out_shape=(
            jax.ShapeDtypeStruct((B, 1), jnp.float32),   # score, one per row
            jax.ShapeDtypeStruct((B, 1), jnp.float32),   # squared error per row
        ),
        grid_spec=pltpu.PrefetchScalarGridSpec(
            num_scalar_prefetch=0,
            grid=grid,
            in_specs=[
                pl.BlockSpec((tb, D), lambda i: (i, 0)),      # emb1 tile
                pl.BlockSpec((tb, D), lambda i: (i, 0)),      # emb2 tile
                pl.BlockSpec((O_pad, D), lambda i: (0, 0)),   # weight (replicated)
                pl.BlockSpec((1, O_pad), lambda i: (0, 0)),   # bias (replicated)
                pl.BlockSpec((tb, 1), lambda i: (i, 0)),      # label tile
            ],
            out_specs=[
                pl.BlockSpec((tb, 1), lambda i: (i, 0)),
                pl.BlockSpec((tb, 1), lambda i: (i, 0)),
            ],
        ),
        compiler_params=pltpu.CompilerParams(
            dimension_semantics=("parallel",),
            vmem_limit_bytes=32 * 1024 * 1024,
        ),
    )(emb1, emb2, weight, bias2, label2)

    loss = jnp.sum(sqerr) / B       # MSE mean over the true batch size
    return loss, score2[:, 0]


def _reference(emb1, emb2, true_label, weight, bias):
    eps = 1e-4
    r1 = emb1 @ weight.T + bias
    r2 = emb2 @ weight.T + bias
    dot = jnp.sum(r1 * r2, axis=1)
    n1 = jnp.sum(r1 * r1, axis=1)
    n2 = jnp.sum(r2 * r2, axis=1)
    score = dot / jnp.sqrt(jnp.maximum(n1 * n2, eps * eps))
    loss = jnp.mean((score - true_label) ** 2)
    return loss, score


if __name__ == "__main__":
    B, word_vec_dim, out_dim = 8, 32, 16

    key = jax.random.PRNGKey(0)
    k1, k2, k3, k4 = jax.random.split(key, 4)

    emb1 = jax.random.normal(k1, (B, word_vec_dim), dtype=jnp.float32)
    emb2 = jax.random.normal(k2, (B, word_vec_dim), dtype=jnp.float32)
    true_label = jax.random.uniform(k3, (B,), dtype=jnp.float32,
                                    minval=-1.0, maxval=1.0)

    # Deterministic xavier_uniform_ init for the reduce_vec_dim Linear weight.
    bound = (6.0 / (word_vec_dim + out_dim)) ** 0.5
    weight = jax.random.uniform(k4, (out_dim, word_vec_dim), dtype=jnp.float32,
                                minval=-bound, maxval=bound)
    bias = jnp.zeros((out_dim,), dtype=jnp.float32)

    loss, score = cosine_distance_loss(emb1, emb2, true_label, weight, bias)
    jax.block_until_ready((loss, score))

    ref_loss, ref_score = _reference(emb1, emb2, true_label, weight, bias)
    assert jnp.allclose(loss, ref_loss, atol=1e-5, rtol=1e-5), (loss, ref_loss)
    assert jnp.allclose(score, ref_score, atol=1e-5, rtol=1e-5)

    print("KERNEL_OK")
</pallas_src>

<mosaic_0001>
module attributes {stable_mosaic.version = 11 : i64} {
  func.func @_cosine_loss_kernel(%arg0: i32, %arg1: memref<8x32xf32, #tpu.memory_space<vmem>>, %arg2: memref<8x32xf32, #tpu.memory_space<vmem>>, %arg3: memref<128x32xf32, #tpu.memory_space<vmem>>, %arg4: memref<1x128xf32, #tpu.memory_space<vmem>>, %arg5: memref<8x1xf32, #tpu.memory_space<vmem>>, %arg6: memref<8x1xf32, #tpu.memory_space<vmem>>, %arg7: memref<8x1xf32, #tpu.memory_space<vmem>>) attributes {dimension_semantics = [#tpu.dimension_semantics<parallel>], iteration_bounds = array<i64: 1>, scalar_prefetch = 0 : i64, scratch_operands = 0 : i64, tpu.core_type = #tpu.core_type<tc>, window_params = [{transform_indices = @transform_0, window_bounds = array<i64: 8, 32>}, {transform_indices = @transform_1, window_bounds = array<i64: 8, 32>}, {pipeline_mode = #tpu.pipeline_mode<synchronous>, transform_indices = @transform_2, window_bounds = array<i64: 128, 32>}, {pipeline_mode = #tpu.pipeline_mode<synchronous>, transform_indices = @transform_3, window_bounds = array<i64: 1, 128>}, {transform_indices = @transform_4, window_bounds = array<i64: 8, 1>}, {transform_indices = @transform_5, window_bounds = array<i64: 8, 1>}, {transform_indices = @transform_6, window_bounds = array<i64: 8, 1>}]} {
    %c0 = arith.constant 0 : index
    %c0_0 = arith.constant 0 : index
    %0 = vector.load %arg1[%c0, %c0_0] : memref<8x32xf32, #tpu.memory_space<vmem>>, vector<8x32xf32>
    %c0_1 = arith.constant 0 : index
    %c0_2 = arith.constant 0 : index
    %1 = vector.load %arg3[%c0_1, %c0_2] : memref<128x32xf32, #tpu.memory_space<vmem>>, vector<128x32xf32>
    %cst = arith.constant dense<0.000000e+00> : vector<8x128xf32>
    %2 = tpu.matmul %0, %1, %cst {dimension_numbers = #tpu.dot_dimension_numbers<[1], [1], [0], [0], [0, 0, 1, 0], [], []>} : vector<8x32xf32>, vector<128x32xf32>, vector<8x128xf32> -> vector<8x128xf32>
    %c0_3 = arith.constant 0 : index
    %c0_4 = arith.constant 0 : index
    %3 = vector.load %arg4[%c0_3, %c0_4] : memref<1x128xf32, #tpu.memory_space<vmem>>, vector<1x128xf32>
    %4 = vector.broadcast %3 : vector<1x128xf32> to vector<8x128xf32>
    %5 = arith.addf %2, %4 : vector<8x128xf32>
    %c0_5 = arith.constant 0 : index
    %c0_6 = arith.constant 0 : index
    %6 = vector.load %arg2[%c0_5, %c0_6] : memref<8x32xf32, #tpu.memory_space<vmem>>, vector<8x32xf32>
    %c0_7 = arith.constant 0 : index
    %c0_8 = arith.constant 0 : index
    %7 = vector.load %arg3[%c0_7, %c0_8] : memref<128x32xf32, #tpu.memory_space<vmem>>, vector<128x32xf32>
    %cst_9 = arith.constant dense<0.000000e+00> : vector<8x128xf32>
    %8 = tpu.matmul %6, %7, %cst_9 {dimension_numbers = #tpu.dot_dimension_numbers<[1], [1], [0], [0], [0, 0, 1, 0], [], []>} : vector<8x32xf32>, vector<128x32xf32>, vector<8x128xf32> -> vector<8x128xf32>
    %c0_10 = arith.constant 0 : index
    %c0_11 = arith.constant 0 : index
    %9 = vector.load %arg4[%c0_10, %c0_11] : memref<1x128xf32, #tpu.memory_space<vmem>>, vector<1x128xf32>
    %10 = vector.broadcast %9 : vector<1x128xf32> to vector<8x128xf32>
    %11 = arith.addf %8, %10 : vector<8x128xf32>
    %12 = arith.mulf %5, %11 : vector<8x128xf32>
    %cst_12 = arith.constant dense<0.000000e+00> : vector<8xf32>
    %13 = vector.multi_reduction <add>, %12, %cst_12 [1] : vector<8x128xf32> to vector<8xf32>
    %14 = vector.shape_cast %13 : vector<8xf32> to vector<8x1xf32>
    %15 = arith.mulf %5, %5 : vector<8x128xf32>
    %cst_13 = arith.constant dense<0.000000e+00> : vector<8xf32>
    %16 = vector.multi_reduction <add>, %15, %cst_13 [1] : vector<8x128xf32> to vector<8xf32>
    %17 = vector.shape_cast %16 : vector<8xf32> to vector<8x1xf32>
    %18 = arith.mulf %11, %11 : vector<8x128xf32>
    %cst_14 = arith.constant dense<0.000000e+00> : vector<8xf32>
    %19 = vector.multi_reduction <add>, %18, %cst_14 [1] : vector<8x128xf32> to vector<8xf32>
    %20 = vector.shape_cast %19 : vector<8xf32> to vector<8x1xf32>
    %21 = arith.mulf %17, %20 : vector<8x1xf32>
    %cst_15 = arith.constant 9.99999993E-9 : f32
    %22 = vector.broadcast %cst_15 : f32 to vector<8x1xf32>
    %23 = arith.maximumf %21, %22 : vector<8x1xf32>
    %24 = math.rsqrt %23 : vector<8x1xf32>
    %25 = arith.mulf %14, %24 : vector<8x1xf32>
    %c0_16 = arith.constant 0 : index
    %c0_17 = arith.constant 0 : index
    %26 = vector.load %arg6[%c0_16, %c0_17] : memref<8x1xf32, #tpu.memory_space<vmem>>, vector<8x1xf32>
    tpu.vector_store %arg6[%c0_16, %c0_17], %25 {strides = array<i32>} : memref<8x1xf32, #tpu.memory_space<vmem>>, vector<8x1xf32>,
    %c0_18 = arith.constant 0 : index
    %c0_19 = arith.constant 0 : index
    %27 = vector.load %arg5[%c0_18, %c0_19] : memref<8x1xf32, #tpu.memory_space<vmem>>, vector<8x1xf32>
    %28 = arith.subf %25, %27 : vector<8x1xf32>
    %c8_i32 = arith.constant 8 : i32
    %29 = arith.muli %arg0, %c8_i32 : i32
    %30 = tpu.iota {dimensions = array<i32: 0>} : vector<8x1xi32>
    %31 = vector.broadcast %29 : i32 to vector<8x1xi32>
    %32 = arith.addi %31, %30 : vector<8x1xi32>
    %c8_i32_20 = arith.constant 8 : i32
    %33 = vector.broadcast %c8_i32_20 : i32 to vector<8x1xi32>
    %34 = arith.cmpi slt, %32, %33 : vector<8x1xi32>
    %35 = arith.mulf %28, %28 : vector<8x1xf32>
    %cst_21 = arith.constant 0.000000e+00 : f32
    %36 = vector.broadcast %cst_21 : f32 to vector<8x1xf32>
    %37 = arith.select %34, %35, %36 : vector<8x1xi1>, vector<8x1xf32>
    %c0_22 = arith.constant 0 : index
    %c0_23 = arith.constant 0 : index
    %38 = vector.load %arg7[%c0_22, %c0_23] : memref<8x1xf32, #tpu.memory_space<vmem>>, vector<8x1xf32>
    tpu.vector_store %arg7[%c0_22, %c0_23], %37 {strides = array<i32>} : memref<8x1xf32, #tpu.memory_space<vmem>>, vector<8x1xf32>,
    return
  }
  func.func @transform_0(%arg0: i32) -> (i32, i32) {
    %c0_i32 = arith.constant 0 : i32
    %c0_i32_0 = arith.constant 0 : i32
    return %arg0, %c0_i32 : i32, i32
  }
  func.func @transform_1(%arg0: i32) -> (i32, i32) {
    %c0_i32 = arith.constant 0 : i32
    %c0_i32_0 = arith.constant 0 : i32
    return %arg0, %c0_i32 : i32, i32
  }
  func.func @transform_2(%arg0: i32) -> (i32, i32) {
    %c0_i32 = arith.constant 0 : i32
    %c0_i32_0 = arith.constant 0 : i32
    %c0_i32_1 = arith.constant 0 : i32
    return %c0_i32, %c0_i32_0 : i32, i32
  }
  func.func @transform_3(%arg0: i32) -> (i32, i32) {
    %c0_i32 = arith.constant 0 : i32
    %c0_i32_0 = arith.constant 0 : i32
    %c0_i32_1 = arith.constant 0 : i32
    return %c0_i32, %c0_i32_0 : i32, i32
  }
  func.func @transform_4(%arg0: i32) -> (i32, i32) {
    %c0_i32 = arith.constant 0 : i32
    %c0_i32_0 = arith.constant 0 : i32
    return %arg0, %c0_i32 : i32, i32
  }
  func.func @transform_5(%arg0: i32) -> (i32, i32) {
    %c0_i32 = arith.constant 0 : i32
    %c0_i32_0 = arith.constant 0 : i32
    return %arg0, %c0_i32 : i32, i32
  }
  func.func @transform_6(%arg0: i32) -> (i32, i32) {
    %c0_i32 = arith.constant 0 : i32
    %c0_i32_0 = arith.constant 0 : i32
    return %arg0, %c0_i32 : i32, i32
  }
}

</mosaic_0001>

<llo_original>
// kernel: tpu_custom_call.1
$region0: #{tpu_custom_call.1}
  #allocation0 [shape = 'u32[]', space=smem, size = 0x4, offset = 0x4, fixed_abs, tag = 'smem constant byte address 0x4 - core index']
  #allocation1 [shape = 'u32[144,128]{1,0:T(1,128)}', space=vmem, size = 0x12000, scoped, tag = 'internal scratch']
  %s0 = inlined_call_operand.vmem [shape: f32[8,32], index: 0, kind: input, shape index: {}]
  %s1 = inlined_call_operand.vmem [shape: f32[8,32], index: 1, kind: input, shape index: {}]
  %s2 = inlined_call_operand.vmem [shape: f32[128,32], index: 2, kind: input, shape index: {}]
  %s3 = inlined_call_operand.vmem [shape: f32[1,128], index: 3, kind: input, shape index: {}]
  %s4 = inlined_call_operand.vmem [shape: f32[8,1], index: 4, kind: input, shape index: {}]
  %s5 = inlined_call_operand.vmem [shape: f32[8,1], index: 5, kind: output, shape index: {0}]
  %s6 = inlined_call_operand.vmem [shape: f32[8,1], index: 6, kind: output, shape index: {1}]
  %7 = xla_tuple %s5, %s6
  %s8 = sld [smem:[#allocation0]]
  $region38: #{tpu_custom_call.1} parent=0
    _
  %s10 = ssub.s32 1, %s8
  %s11 = scalar_select 0, %s10, %s8
  // Predicated region
  $region2: #{tpu_custom_call.1} parent=0 // pred_check
    _
  $region3: #{tpu_custom_call.1} parent=0 // pred_check_branch
    %13 = sbr.rel (0) target = $region5
  $region4: #{tpu_custom_call.1} parent=0 // pred_region
    _
  $region5: #{tpu_custom_call.1} parent=0 // pred_fallthru
    _
  // Predicated region
  $region6: #{tpu_custom_call.1} parent=0 // pred_check
    _
  $region7: #{tpu_custom_call.1} parent=0 // pred_check_branch
    %15 = sbr.rel (0) target = $region9
  $region8: #{tpu_custom_call.1} parent=0 // pred_region
    _
  $region9: #{tpu_custom_call.1} parent=0 // pred_fallthru
    _
  // Predicated region
  $region10: #{tpu_custom_call.1} parent=0 // pred_check
    _
  $region11: #{tpu_custom_call.1} parent=0 // pred_check_branch
    %17 = sbr.rel (0) target = $region13
  $region12: #{tpu_custom_call.1} parent=0 // pred_region
    _
  $region13: #{tpu_custom_call.1} parent=0 // pred_fallthru
    _
  // Predicated region
  $region14: #{tpu_custom_call.1} parent=0 // pred_check
    _
  $region15: #{tpu_custom_call.1} parent=0 // pred_check_branch
    %19 = sbr.rel (0) target = $region17
  $region16: #{tpu_custom_call.1} parent=0 // pred_region
    _
  $region17: #{tpu_custom_call.1} parent=0 // pred_fallthru
    _
  // Predicated region
  $region18: #{tpu_custom_call.1} parent=0 // pred_check
    _
  $region19: #{tpu_custom_call.1} parent=0 // pred_check_branch
    %21 = sbr.rel (0) target = $region21
  $region20: #{tpu_custom_call.1} parent=0 // pred_region
    _
  $region21: #{tpu_custom_call.1} parent=0 // pred_fallthru
    _
  %v22 = vld [vmem:[%s0] sm:$0xff]
  %v23 = vld [vmem:[%s2] sm:$0xff]
  %v24 = vld [vmem:[%s2 + $0x8] sm:$0xff]
  %v25 = vld [vmem:[%s2 + $0x10] sm:$0xff]
  %v26 = vld [vmem:[%s2 + $0x18] sm:$0xff]
  %v27 = vld [vmem:[%s2 + $0x20] sm:$0xff]
  %v28 = vld [vmem:[%s2 + $0x28] sm:$0xff]
  %v29 = vld [vmem:[%s2 + $0x30] sm:$0xff]
  %v30 = vld [vmem:[%s2 + $0x38] sm:$0xff]
  %v31 = vld [vmem:[%s2 + $0x40] sm:$0xff]
  %v32 = vld [vmem:[%s2 + $0x48] sm:$0xff]
  %v33 = vld [vmem:[%s2 + $0x50] sm:$0xff]
  %v34 = vld [vmem:[%s2 + $0x58] sm:$0xff]
  %v35 = vld [vmem:[%s2 + $0x60] sm:$0xff]
  %v36 = vld [vmem:[%s2 + $0x68] sm:$0xff]
  %v37 = vld [vmem:[%s2 + $0x70] sm:$0xff]
  %v38 = vld [vmem:[%s2 + $0x78] sm:$0xff]
  %v39 = vld [vmem:[%s3] sm:$0x1]
  %v41 = vlaneseq
  %v42 = vshrl.u32 %v41, 7
  %v43 = vsub.s32 0, %v42
  %v44 = vrot.slane %v39, %v43
  %vm46 = vcmask 261120
  %v48 = vsel %vm46, %v22, 0
  %v51 = vsel %vm46, %v23, 0
  %v54 = vsel %vm46, %v24, 0
  %v57 = vsel %vm46, %v25, 0
  %v60 = vsel %vm46, %v26, 0
  %v63 = vsel %vm46, %v27, 0
  %v66 = vsel %vm46, %v28, 0
  %v69 = vsel %vm46, %v29, 0
  %v72 = vsel %vm46, %v30, 0
  %v75 = vsel %vm46, %v31, 0
  %v78 = vsel %vm46, %v32, 0
  %v81 = vsel %vm46, %v33, 0
  %v84 = vsel %vm46, %v34, 0
  %v87 = vsel %vm46, %v35, 0
  %v90 = vsel %vm46, %v36, 0
  %v93 = vsel %vm46, %v37, 0
  %v96 = vsel %vm46, %v38, 0
  %98 = vmatprep.subr.mxu0 0.0
  %99 = vmatpush1.xpose.msra.mxu0 %v51
  %100 = vmatprep.subr.mxu0 0.0
  %101 = vmatpush1.xpose.msra.mxu0 %v54
  %102 = vmatprep.subr.mxu0 0.0
  %103 = vmatpush1.xpose.msra.mxu0 %v57
  %104 = vmatprep.subr.mxu0 0.0
  %105 = vmatpush1.xpose.msra.mxu0 %v60
  %106 = vmatprep.subr.mxu0 0.0
  %107 = vmatpush1.xpose.msra.mxu0 %v63
  %108 = vmatprep.subr.mxu0 0.0
  %109 = vmatpush1.xpose.msra.mxu0 %v66
  %110 = vmatprep.subr.mxu0 0.0
  %111 = vmatpush1.xpose.msra.mxu0 %v69
  %112 = vmatprep.subr.mxu0 0.0
  %113 = vmatpush1.xpose.msra.mxu0 %v72
  %114 = vmatprep.subr.mxu0 0.0
  %115 = vmatpush1.xpose.msra.mxu0 %v75
  %116 = vmatprep.subr.mxu0 0.0
  %117 = vmatpush1.xpose.msra.mxu0 %v78
  %118 = vmatprep.subr.mxu0 0.0
  %119 = vmatpush1.xpose.msra.mxu0 %v81
  %120 = vmatprep.subr.mxu0 0.0
  %121 = vmatpush1.xpose.msra.mxu0 %v84
  %122 = vmatprep.subr.mxu0 0.0
  %123 = vmatpush1.xpose.msra.mxu0 %v87
  %124 = vmatprep.subr.mxu0 0.0
  %125 = vmatpush1.xpose.msra.mxu0 %v90
  %126 = vmatprep.subr.mxu0 0.0
  %127 = vmatpush1.xpose.msra.mxu0 %v93
  %128 = vmatprep.subr.mxu0 0.0
  %129 = vmatpush1.xpose.msra.mxu0 %v96
  %130 = vmatprep.subr.mxu0 0.0
  %131 = vmatpush1.xpose.msra.mxu0 0.0
  %132 = vmatprep.subr.mxu0 0.0
  %133 = vmatpush1.xpose.msra.mxu0 0.0
  %134 = vmatprep.subr.mxu0 0.0
  %135 = vmatpush1.xpose.msra.mxu0 0.0
  %136 = vmatprep.subr.mxu0 0.0
  %137 = vmatpush1.xpose.msra.mxu0 0.0
  %138 = vmatprep.subr.mxu0 0.0
  %139 = vmatpush1.xpose.msra.mxu0 0.0
  %140 = vmatprep.subr.mxu0 0.0
  %141 = vmatpush1.xpose.msra.mxu0 0.0
  %142 = vmatprep.subr.mxu0 0.0
  %143 = vmatpush1.xpose.msra.mxu0 0.0
  %144 = vmatprep.subr.mxu0 0.0
  %145 = vmatpush1.xpose.msra.mxu0 0.0
  %146 = vmatprep.subr.mxu0 0.0
  %147 = vmatpush1.xpose.msra.mxu0 0.0
  %148 = vmatprep.subr.mxu0 0.0
  %149 = vmatpush1.xpose.msra.mxu0 0.0
  %150 = vmatprep.subr.mxu0 0.0
  %151 = vmatpush1.xpose.msra.mxu0 0.0
  %152 = vmatprep.subr.mxu0 0.0
  %153 = vmatpush1.xpose.msra.mxu0 0.0
  %154 = vmatprep.subr.mxu0 0.0
  %155 = vmatpush1.xpose.msra.mxu0 0.0
  %156 = vmatprep.subr.mxu0 0.0
  %157 = vmatpush1.xpose.msra.mxu0 0.0
  %158 = vmatprep.subr.mxu0 0.0
  %159 = vmatpush1.xpose.msra.mxu0 0.0
  %160 = vmatprep.subr.mxu0 0.0
  %161 = vmatpush1.xpose.msra.mxu0 0.0
  %162 = vmatprep.mubr.f32.mxu0 0.0
  %163 = vmatmul.mubr.f32.gmra.mrb[0].mxu0 %v48
  %v164 = vpop.f32.mrb[0].mxu0
  %v165 = vadd.f32 %v44, %v164
  %v166 = vpop.f32.mrb[0].mxu0
  %167 = vdwg.mxu0
  %v168 = vld [vmem:[%s1] sm:$0xff]
  %v170 = vsel %vm46, %v168, 0
  %172 = vmatprep.subr.mxu0 0.0
  %173 = vmatpush1.xpose.msra.mxu0 %v51
  %174 = vmatprep.subr.mxu0 0.0
  %175 = vmatpush1.xpose.msra.mxu0 %v54
  %176 = vmatprep.subr.mxu0 0.0
  %177 = vmatpush1.xpose.msra.mxu0 %v57
  %178 = vmatprep.subr.mxu0 0.0
  %179 = vmatpush1.xpose.msra.mxu0 %v60
  %180 = vmatprep.subr.mxu0 0.0
  %181 = vmatpush1.xpose.msra.mxu0 %v63
  %182 = vmatprep.subr.mxu0 0.0
  %183 = vmatpush1.xpose.msra.mxu0 %v66
  %184 = vmatprep.subr.mxu0 0.0
  %185 = vmatpush1.xpose.msra.mxu0 %v69
  %186 = vmatprep.subr.mxu0 0.0
  %187 = vmatpush1.xpose.msra.mxu0 %v72
  %188 = vmatprep.subr.mxu0 0.0
  %189 = vmatpush1.xpose.msra.mxu0 %v75
  %190 = vmatprep.subr.mxu0 0.0
  %191 = vmatpush1.xpose.msra.mxu0 %v78
  %192 = vmatprep.subr.mxu0 0.0
  %193 = vmatpush1.xpose.msra.mxu0 %v81
  %194 = vmatprep.subr.mxu0 0.0
  %195 = vmatpush1.xpose.msra.mxu0 %v84
  %196 = vmatprep.subr.mxu0 0.0
  %197 = vmatpush1.xpose.msra.mxu0 %v87
  %198 = vmatprep.subr.mxu0 0.0
  %199 = vmatpush1.xpose.msra.mxu0 %v90
  %200 = vmatprep.subr.mxu0 0.0
  %201 = vmatpush1.xpose.msra.mxu0 %v93
  %202 = vmatprep.subr.mxu0 0.0
  %203 = vmatpush1.xpose.msra.mxu0 %v96
  %204 = vmatprep.subr.mxu0 0.0
  %205 = vmatpush1.xpose.msra.mxu0 0.0
  %206 = vmatprep.subr.mxu0 0.0
  %207 = vmatpush1.xpose.msra.mxu0 0.0
  %208 = vmatprep.subr.mxu0 0.0
  %209 = vmatpush1.xpose.msra.mxu0 0.0
  %210 = vmatprep.subr.mxu0 0.0
  %211 = vmatpush1.xpose.msra.mxu0 0.0
  %212 = vmatprep.subr.mxu0 0.0
  %213 = vmatpush1.xpose.msra.mxu0 0.0
  %214 = vmatprep.subr.mxu0 0.0
  %215 = vmatpush1.xpose.msra.mxu0 0.0
  %216 = vmatprep.subr.mxu0 0.0
  %217 = vmatpush1.xpose.msra.mxu0 0.0
  %218 = vmatprep.subr.mxu0 0.0
  %219 = vmatpush1.xpose.msra.mxu0 0.0
  %220 = vmatprep.subr.mxu0 0.0
  %221 = vmatpush1.xpose.msra.mxu0 0.0
  %222 = vmatprep.subr.mxu0 0.0
  %223 = vmatpush1.xpose.msra.mxu0 0.0
  %224 = vmatprep.subr.mxu0 0.0
  %225 = vmatpush1.xpose.msra.mxu0 0.0
  %226 = vmatprep.subr.mxu0 0.0
  %227 = vmatpush1.xpose.msra.mxu0 0.0
  %228 = vmatprep.subr.mxu0 0.0
  %229 = vmatpush1.xpose.msra.mxu0 0.0
  %230 = vmatprep.subr.mxu0 0.0
  %231 = vmatpush1.xpose.msra.mxu0 0.0
  %232 = vmatprep.subr.mxu0 0.0
  %233 = vmatpush1.xpose.msra.mxu0 0.0
  %234 = vmatprep.subr.mxu0 0.0
  %235 = vmatpush1.xpose.msra.mxu0 0.0
  %236 = vmatprep.mubr.f32.mxu0 0.0
  %237 = vmatmul.mubr.f32.gmra.mrb[0].mxu0 %v170
  %v238 = vpop.f32.mrb[0].mxu0
  %v239 = vadd.f32 %v44, %v238
  %v240 = vpop.f32.mrb[0].mxu0
  %241 = vdwg.mxu0
  %v242 = vmul.f32 %v165, %v239
  %243 = vadd.xlane.f32.xlu0 %v242
  %v244 = vpop.xlane.xlu0 %243
  %v245 = vmul.f32 %v165, %v165
  %246 = vadd.xlane.f32.xlu0 %v245
  %v247 = vpop.xlane.xlu0 %246
  %v248 = vmul.f32 %v239, %v239
  %249 = vadd.xlane.f32.xlu0 %v248
  %v250 = vpop.xlane.xlu0 %249
  %v251 = vmul.f32 %v247, %v250
  %v252 = vmax.f32 %v251, 1e-08
  %v253 = vrsqrt.pop %v252
  %v254 = vmul.f32 %v244, %v253
  %vm255 = vcmask 7168
  %256 = vst.msk [vmem:[%s5] sm:$0xff] %vm255, %v254
  %v257 = vld [vmem:[%s4] sm:$0xff]
  %v258 = vsub.f32 %v254, %v257
  %s259 = smul.u32 0, 8
  %v260 = vlaneseq
  %v261 = vshrl.u32 %v260, 7
  %v262 = vstv %s259
  %v263 = vadd.s32 %v262, %v261
  %vm264 = vcmp.lt.s32.totalorder %v263, 8
  %v265 = vmul.f32 %v258, %v258
  %v266 = vsel %vm264, %v265, 0.0
  %267 = vst.msk [vmem:[%s6] sm:$0xff] %vm255, %v266
  // Predicated region
  $region22: #{tpu_custom_call.1} parent=0 // pred_check
    _
  $region23: #{tpu_custom_call.1} parent=0 // pred_check_branch
    %269 = sbr.rel (0) target = $region25
  $region24: #{tpu_custom_call.1} parent=0 // pred_region
    _
  $region25: #{tpu_custom_call.1} parent=0 // pred_fallthru
    _
  // Predicated region
  $region26: #{tpu_custom_call.1} parent=0 // pred_check
    _
  $region27: #{tpu_custom_call.1} parent=0 // pred_check_branch
    %271 = sbr.rel (0) target = $region29
  $region28: #{tpu_custom_call.1} parent=0 // pred_region
    _
  $region29: #{tpu_custom_call.1} parent=0 // pred_fallthru
    _
  // Predicated region
  $region30: #{tpu_custom_call.1} parent=0 // pred_check
    _
  $region31: #{tpu_custom_call.1} parent=0 // pred_check_branch
    %273 = sbr.rel (0) target = $region33
  $region32: #{tpu_custom_call.1} parent=0 // pred_region
    _
  $region33: #{tpu_custom_call.1} parent=0 // pred_fallthru
    _
  // Predicated region
  $region34: #{tpu_custom_call.1} parent=0 // pred_check
    _
  $region35: #{tpu_custom_call.1} parent=0 // pred_check_branch
    %275 = sbr.rel (0) target = $region37
  $region36: #{tpu_custom_call.1} parent=0 // pred_region
    _
  $region37: #{tpu_custom_call.1} parent=0 // pred_fallthru
    _

</llo_original>
